<compile_context>
chip_gen: v6e
topology: v6e:2x2x1
jax: 0.10.0
libtpu: 0.0.40
codegen_flags: <defaults>
</compile_context>

<pallas_src>
import jax
import jax.numpy as jnp
from jax import lax
from jax.experimental import pallas as pl
from jax.experimental.pallas import tpu as pltpu


def _round_up(x, m):
    return ((x + m - 1) // m) * m


def make_ritznet_kernel(depth, d_in, activation_dtype):
    """Builds the RitzNet forward kernel.

    activation_dtype: dtype in which tanh is evaluated and the hidden state is
    carried between layers (f32 everywhere; bf16 on v6e/v7x where EUP/MXU are
    bf16-native).  Matmul accumulation is always f32 via preferred_element_type.
    """

    def kernel(x_ref, win_ref, bin_ref, wh_ref, bh_ref, wout_ref, bout_ref, o_ref):
        cd = win_ref.dtype  # MXU operand dtype (f32 or bf16)

        def activate(z_f32):
            # pre-activation is f32 (f32 dot accumulation + f32 bias); cast once,
            # tanh in activation_dtype (bf16 tanh ~2x EUP throughput on v6e/v7x).
            return jnp.tanh(z_f32.astype(activation_dtype))

        # ---- linearIn + tanh -------------------------------------------------
        if d_in <= 8:
            # Tiny K: a (tile_m, d)@(d, wp) MXU op pays nearly a full systolic
            # pass for 1/64 useful depth; do d broadcast FMAs on the VPU instead.
            x = x_ref[...].astype(jnp.float32)
            w_in = win_ref[...].astype(jnp.float32)
            z = bin_ref[...] + x[:, 0:1] * w_in[0:1, :]
            for k in range(1, d_in):
                z = z + x[:, k:k + 1] * w_in[k:k + 1, :]
        else:
            z = (jnp.dot(x_ref[...].astype(cd), win_ref[...],
                         preferred_element_type=jnp.float32)
                 + bin_ref[...])
        h = activate(z)

        # ---- hidden stack: depth x (linear + tanh) ---------------------------
        # depth is small & static -> Python unroll.  h.astype(cd) is a trace-time
        # no-op when activation_dtype == cd (bf16 path has no per-layer cast).
        for i in range(depth):
            z = (jnp.dot(h.astype(cd), wh_ref[i],
                         preferred_element_type=jnp.float32)
                 + bh_ref[i])                      # (1, wp) static index, broadcasts
            h = activate(z)

        # ---- linearOut, TRANSPOSED: (dd_pad8, tile_m), batch on lanes --------
        # Lane-dense unmasked store; padded output is 8 sublane rows instead of
        # 128 lanes -> 16x less output HBM traffic than padding dd -> 128.
        out_t = lax.dot_general(
            wout_ref[...], h.astype(cd),
            dimension_numbers=(((1,), (1,)), ((), ())),   # contract the wp axis
            preferred_element_type=jnp.float32,
        ) + bout_ref[...]
        o_ref[...] = out_t.astype(o_ref.dtype)

    return kernel


def prepare_ritznet_params(w_in, b_in, w_hid, b_hid, w_out, b_out, *,
                           compute_dtype=None, activation_dtype=None):
    """One-time parameter preparation (hoisted out of the per-call forward).

    Inputs use the x @ W + b convention:
      w_in (d, width), b_in (1, width), w_hid (depth, width, width),
      b_hid (depth, width), w_out (width, dd), b_out (1, dd).

    Pads width -> multiple of 128 (full-lane MXU tiles) and dd -> multiple of 8
    (sublane-aligned transposed output).  tanh(0) = 0 and zero rows/cols
    contribute nothing, so zero padding (including biases) is exact.

    compute_dtype: optional MXU operand dtype (jnp.bfloat16 for v5e/v6e/v7x).
    activation_dtype: dtype for tanh / carried hidden state.  Defaults to
    compute_dtype (bf16 activations for v6e/v7x); pass jnp.float32 explicitly
    on v5e (no bf16 EUP/VPU).  Biases always stay f32.
    """
    d, width = w_in.shape
    depth = w_hid.shape[0]
    dd = w_out.shape[1]

    wp = _round_up(width, 128)
    ddp = _round_up(dd, 8)

    f32 = jnp.float32
    w_in_p = jnp.pad(w_in.astype(f32), ((0, 0), (0, wp - width)))
    b_in_p = jnp.pad(b_in.astype(f32), ((0, 0), (0, wp - width)))
    w_hid_p = jnp.pad(w_hid.astype(f32), ((0, 0), (0, wp - width), (0, wp - width)))
    b_hid_p = jnp.pad(b_hid.astype(f32), ((0, 0), (0, wp - width)))[:, None, :]
    # linearOut stored transposed: (width, dd) -> (dd, width) -> padded (ddp, wp)
    w_out_tp = jnp.pad(w_out.astype(f32).T, ((0, ddp - dd), (0, wp - width)))
    b_out_tp = jnp.pad(b_out.astype(f32).T, ((0, ddp - dd), (0, 0)))

    if compute_dtype is not None:
        w_in_p = w_in_p.astype(compute_dtype)
        w_hid_p = w_hid_p.astype(compute_dtype)
        w_out_tp = w_out_tp.astype(compute_dtype)

    if activation_dtype is None:
        activation_dtype = compute_dtype if compute_dtype is not None else jnp.float32

    return dict(
        w_in=w_in_p, b_in=b_in_p, w_hid=w_hid_p, b_hid=b_hid_p,
        w_out_t=w_out_tp, b_out_t=b_out_tp,
        d=d, width=width, depth=depth, dd=dd, wp=wp, ddp=ddp,
        activation_dtype=activation_dtype,
    )


def ritznet_forward(x, params, *, tile_m=None):
    N, d = x.shape
    assert d == params["d"], "input feature dim mismatch"
    depth, dd = params["depth"], params["dd"]
    wp, ddp = params["wp"], params["ddp"]
    out_dtype = x.dtype

    # ---- batch tiling: big tiles (fewer ~0.35us pipeline steps, full MXU rows)
    # while keeping >=2 grid steps at large N so the "parallel" axis shards work
    # across v7x's two TensorCores.  VMEM per step stays tiny (< ~3 MB at
    # tile_m=2048: ~0.5 MB weights + double-buffered x/out tiles), far below
    # even v7x's 32 MiB default scoped limit.
    if tile_m is None:
        if N <= 1024:
            tile_m = N
        elif N % 2048 == 0:
            tile_m = 2048
        else:
            tile_m = 1024
    assert N % tile_m == 0, "pad the batch so N % tile_m == 0"
    assert tile_m == N or tile_m % 128 == 0, \
        "tile_m must be a multiple of 128 (lane-dense transposed output) or == N"

    kernel = make_ritznet_kernel(depth, d, params["activation_dtype"])
    grid = (N // tile_m,)

    # Advisory cost estimate so XLA can overlap neighbouring ops with this kernel.
    flops = 2 * N * (d * wp + depth * wp * wp + wp * ddp)
    transcendentals = N * wp * (depth + 1)
    param_bytes = sum(int(params[k].size) * params[k].dtype.itemsize
                      for k in ("w_in", "b_in", "w_hid", "b_hid", "w_out_t", "b_out_t"))
    bytes_accessed = int(x.size * x.dtype.itemsize + param_bytes
                         + N * ddp * out_dtype.itemsize)

    out_t = pl.pallas_call(
        kernel,
        out_shape=jax.ShapeDtypeStruct((ddp, N), out_dtype),
        grid_spec=pltpu.PrefetchScalarGridSpec(
            num_scalar_prefetch=0,
            grid=grid,
            in_specs=[
                pl.BlockSpec((tile_m, d), lambda i: (i, 0)),            # x tile
                pl.BlockSpec((d, wp), lambda i: (0, 0)),                # W_in (full)
                pl.BlockSpec((1, wp), lambda i: (0, 0)),                # b_in
                pl.BlockSpec((depth, wp, wp), lambda i: (0, 0, 0)),     # hidden Ws
                pl.BlockSpec((depth, 1, wp), lambda i: (0, 0, 0)),      # hidden bs
                pl.BlockSpec((ddp, wp), lambda i: (0, 0)),              # W_out^T
                pl.BlockSpec((ddp, 1), lambda i: (0, 0)),               # b_out^T
            ],
            out_specs=pl.BlockSpec((ddp, tile_m), lambda i: (0, i)),    # lane-dense
        ),
        compiler_params=pltpu.CompilerParams(
            dimension_semantics=("parallel",),
        ),
        cost_estimate=pl.CostEstimate(
            flops=flops,
            transcendentals=transcendentals,
            bytes_accessed=bytes_accessed,
        ),
    )(x, params["w_in"], params["b_in"], params["w_hid"], params["b_hid"],
      params["w_out_t"], params["b_out_t"])

    # drop zero-padded rows and return (N, dd)
    return out_t[:dd, :].T


def ritznet_reference(x, w_in, b_in, w_hid, b_hid, w_out, b_out):
    h = jnp.tanh(x @ w_in + b_in)
    for i in range(w_hid.shape[0]):
        h = jnp.tanh(h @ w_hid[i] + b_hid[i: i + 1])
    return h @ w_out + b_out


if __name__ == "__main__":
    # params dict from the PyTorch module: d (input dim), width, depth, dd (output dim)
    params_cfg = {"d": 2, "width": 32, "depth": 3, "dd": 1}
    N = 64  # batch of interpolation points

    key = jax.random.PRNGKey(0)
    k_x, k_win, k_bin, k_wh, k_bh, k_wout, k_bout = jax.random.split(key, 7)

    d, width, depth, dd = (params_cfg["d"], params_cfg["width"],
                           params_cfg["depth"], params_cfg["dd"])

    x = jax.random.normal(k_x, (N, d), dtype=jnp.float32)

    # Deterministic synthetic parameters (nn.Linear shapes, pre-transposed to (in, out)).
    scale_in = 1.0 / jnp.sqrt(jnp.float32(d))
    scale_h = 1.0 / jnp.sqrt(jnp.float32(width))
    w_in = jax.random.uniform(k_win, (d, width), jnp.float32, -scale_in, scale_in)
    b_in = jax.random.uniform(k_bin, (1, width), jnp.float32, -scale_in, scale_in)
    w_hid = jax.random.uniform(k_wh, (depth, width, width), jnp.float32, -scale_h, scale_h)
    b_hid = jax.random.uniform(k_bh, (depth, width), jnp.float32, -scale_h, scale_h)
    w_out = jax.random.uniform(k_wout, (width, dd), jnp.float32, -scale_h, scale_h)
    b_out = jax.random.uniform(k_bout, (1, dd), jnp.float32, -scale_h, scale_h)

    ref = ritznet_reference(x, w_in, b_in, w_hid, b_hid, w_out, b_out)

    # f32 path: strict check against the f32 reference.
    p_f32 = prepare_ritznet_params(w_in, b_in, w_hid, b_hid, w_out, b_out)
    out = jax.block_until_ready(ritznet_forward(x, p_f32))
    assert out.shape == (N, dd)
    assert jnp.allclose(out, ref, atol=1e-5, rtol=1e-5), "f32 kernel mismatch vs reference"

    # bf16 MXU path (looser tolerance).  activation_dtype=jnp.float32 here keeps
    # the demo safe on every generation (v5e has no bf16 EUP); on v6e/v7x omit it
    # to also run tanh in bf16 (the default when compute_dtype is set).
    p_bf16 = prepare_ritznet_params(w_in, b_in, w_hid, b_hid, w_out, b_out,
                                    compute_dtype=jnp.bfloat16,
                                    activation_dtype=jnp.float32)
    out_bf16 = jax.block_until_ready(ritznet_forward(x, p_bf16))
    assert out_bf16.shape == (N, dd)
    assert jnp.allclose(out_bf16, ref, atol=5e-2, rtol=5e-2), "bf16 kernel mismatch vs reference"

    print("KERNEL_OK")
</pallas_src>

<mosaic_0001>
module attributes {stable_mosaic.version = 11 : i64} {
  func.func @kernel(%arg0: i32, %arg1: memref<64x2xf32, #tpu.memory_space<vmem>>, %arg2: memref<2x128xf32, #tpu.memory_space<vmem>>, %arg3: memref<1x128xf32, #tpu.memory_space<vmem>>, %arg4: memref<3x128x128xf32, #tpu.memory_space<vmem>>, %arg5: memref<3x1x128xf32, #tpu.memory_space<vmem>>, %arg6: memref<8x128xf32, #tpu.memory_space<vmem>>, %arg7: memref<8x1xf32, #tpu.memory_space<vmem>>, %arg8: memref<8x64xf32, #tpu.memory_space<vmem>>) attributes {dimension_semantics = [#tpu.dimension_semantics<parallel>], iteration_bounds = array<i64: 1>, scalar_prefetch = 0 : i64, scratch_operands = 0 : i64, tpu.core_type = #tpu.core_type<tc>, window_params = [{transform_indices = @transform_0, window_bounds = array<i64: 64, 2>}, {pipeline_mode = #tpu.pipeline_mode<synchronous>, transform_indices = @transform_1, window_bounds = array<i64: 2, 128>}, {pipeline_mode = #tpu.pipeline_mode<synchronous>, transform_indices = @transform_2, window_bounds = array<i64: 1, 128>}, {pipeline_mode = #tpu.pipeline_mode<synchronous>, transform_indices = @transform_3, window_bounds = array<i64: 3, 128, 128>}, {pipeline_mode = #tpu.pipeline_mode<synchronous>, transform_indices = @transform_4, window_bounds = array<i64: 3, 1, 128>}, {pipeline_mode = #tpu.pipeline_mode<synchronous>, transform_indices = @transform_5, window_bounds = array<i64: 8, 128>}, {pipeline_mode = #tpu.pipeline_mode<synchronous>, transform_indices = @transform_6, window_bounds = array<i64: 8, 1>}, {transform_indices = @transform_7, window_bounds = array<i64: 8, 64>}]} {
    %c0 = arith.constant 0 : index
    %c0_0 = arith.constant 0 : index
    %0 = vector.load %arg1[%c0, %c0_0] : memref<64x2xf32, #tpu.memory_space<vmem>>, vector<64x2xf32>
    %c0_1 = arith.constant 0 : index
    %c0_2 = arith.constant 0 : index
    %1 = vector.load %arg2[%c0_1, %c0_2] : memref<2x128xf32, #tpu.memory_space<vmem>>, vector<2x128xf32>
    %c0_3 = arith.constant 0 : index
    %c0_4 = arith.constant 0 : index
    %2 = vector.load %arg3[%c0_3, %c0_4] : memref<1x128xf32, #tpu.memory_space<vmem>>, vector<1x128xf32>
    %3 = vector.extract_strided_slice %0 {offsets = [0, 0], sizes = [64, 1], strides = [1, 1]} : vector<64x2xf32> to vector<64x1xf32>
    %4 = vector.extract_strided_slice %1 {offsets = [0, 0], sizes = [1, 128], strides = [1, 1]} : vector<2x128xf32> to vector<1x128xf32>
    %5 = vector.broadcast %3 : vector<64x1xf32> to vector<64x128xf32>
    %6 = vector.broadcast %4 : vector<1x128xf32> to vector<64x128xf32>
    %7 = arith.mulf %5, %6 : vector<64x128xf32>
    %8 = vector.broadcast %2 : vector<1x128xf32> to vector<64x128xf32>
    %9 = arith.addf %8, %7 : vector<64x128xf32>
    %10 = vector.extract_strided_slice %0 {offsets = [0, 1], sizes = [64, 1], strides = [1, 1]} : vector<64x2xf32> to vector<64x1xf32>
    %11 = vector.extract_strided_slice %1 {offsets = [1, 0], sizes = [1, 128], strides = [1, 1]} : vector<2x128xf32> to vector<1x128xf32>
    %12 = vector.broadcast %10 : vector<64x1xf32> to vector<64x128xf32>
    %13 = vector.broadcast %11 : vector<1x128xf32> to vector<64x128xf32>
    %14 = arith.mulf %12, %13 : vector<64x128xf32>
    %15 = arith.addf %9, %14 : vector<64x128xf32>
    %16 = math.tanh %15 : vector<64x128xf32>
    %c0_5 = arith.constant 0 : index
    %c0_6 = arith.constant 0 : index
    %c0_7 = arith.constant 0 : index
    %17 = vector.load %arg4[%c0_5, %c0_6, %c0_7] : memref<3x128x128xf32, #tpu.memory_space<vmem>>, vector<1x128x128xf32>
    %18 = vector.shape_cast %17 : vector<1x128x128xf32> to vector<128x128xf32>
    %cst = arith.constant dense<0.000000e+00> : vector<64x128xf32>
    %19 = tpu.matmul %16, %18, %cst {dimension_numbers = #tpu.dot_dimension_numbers<[1], [0], [0], [1], [0, 0, 1, 1], [], []>} : vector<64x128xf32>, vector<128x128xf32>, vector<64x128xf32> -> vector<64x128xf32>
    %c0_8 = arith.constant 0 : index
    %c0_9 = arith.constant 0 : index
    %c0_10 = arith.constant 0 : index
    %20 = vector.load %arg5[%c0_8, %c0_9, %c0_10] : memref<3x1x128xf32, #tpu.memory_space<vmem>>, vector<1x1x128xf32>
    %21 = vector.shape_cast %20 : vector<1x1x128xf32> to vector<1x128xf32>
    %22 = vector.broadcast %21 : vector<1x128xf32> to vector<64x128xf32>
    %23 = arith.addf %19, %22 : vector<64x128xf32>
    %24 = math.tanh %23 : vector<64x128xf32>
    %c1 = arith.constant 1 : index
    %c0_11 = arith.constant 0 : index
    %c0_12 = arith.constant 0 : index
    %25 = vector.load %arg4[%c1, %c0_11, %c0_12] : memref<3x128x128xf32, #tpu.memory_space<vmem>>, vector<1x128x128xf32>
    %26 = vector.shape_cast %25 : vector<1x128x128xf32> to vector<128x128xf32>
    %cst_13 = arith.constant dense<0.000000e+00> : vector<64x128xf32>
    %27 = tpu.matmul %24, %26, %cst_13 {dimension_numbers = #tpu.dot_dimension_numbers<[1], [0], [0], [1], [0, 0, 1, 1], [], []>} : vector<64x128xf32>, vector<128x128xf32>, vector<64x128xf32> -> vector<64x128xf32>
    %c1_14 = arith.constant 1 : index
    %c0_15 = arith.constant 0 : index
    %c0_16 = arith.constant 0 : index
    %28 = vector.load %arg5[%c1_14, %c0_15, %c0_16] : memref<3x1x128xf32, #tpu.memory_space<vmem>>, vector<1x1x128xf32>
    %29 = vector.shape_cast %28 : vector<1x1x128xf32> to vector<1x128xf32>
    %30 = vector.broadcast %29 : vector<1x128xf32> to vector<64x128xf32>
    %31 = arith.addf %27, %30 : vector<64x128xf32>
    %32 = math.tanh %31 : vector<64x128xf32>
    %c2 = arith.constant 2 : index
    %c0_17 = arith.constant 0 : index
    %c0_18 = arith.constant 0 : index
    %33 = vector.load %arg4[%c2, %c0_17, %c0_18] : memref<3x128x128xf32, #tpu.memory_space<vmem>>, vector<1x128x128xf32>
    %34 = vector.shape_cast %33 : vector<1x128x128xf32> to vector<128x128xf32>
    %cst_19 = arith.constant dense<0.000000e+00> : vector<64x128xf32>
    %35 = tpu.matmul %32, %34, %cst_19 {dimension_numbers = #tpu.dot_dimension_numbers<[1], [0], [0], [1], [0, 0, 1, 1], [], []>} : vector<64x128xf32>, vector<128x128xf32>, vector<64x128xf32> -> vector<64x128xf32>
    %c2_20 = arith.constant 2 : index
    %c0_21 = arith.constant 0 : index
    %c0_22 = arith.constant 0 : index
    %36 = vector.load %arg5[%c2_20, %c0_21, %c0_22] : memref<3x1x128xf32, #tpu.memory_space<vmem>>, vector<1x1x128xf32>
    %37 = vector.shape_cast %36 : vector<1x1x128xf32> to vector<1x128xf32>
    %38 = vector.broadcast %37 : vector<1x128xf32> to vector<64x128xf32>
    %39 = arith.addf %35, %38 : vector<64x128xf32>
    %40 = math.tanh %39 : vector<64x128xf32>
    %c0_23 = arith.constant 0 : index
    %c0_24 = arith.constant 0 : index
    %41 = vector.load %arg6[%c0_23, %c0_24] : memref<8x128xf32, #tpu.memory_space<vmem>>, vector<8x128xf32>
    %cst_25 = arith.constant dense<0.000000e+00> : vector<8x64xf32>
    %42 = tpu.matmul %41, %40, %cst_25 {dimension_numbers = #tpu.dot_dimension_numbers<[1], [1], [0], [0], [0, 0, 1, 0], [], []>} : vector<8x128xf32>, vector<64x128xf32>, vector<8x64xf32> -> vector<8x64xf32>
    %c0_26 = arith.constant 0 : index
    %c0_27 = arith.constant 0 : index
    %43 = vector.load %arg7[%c0_26, %c0_27] : memref<8x1xf32, #tpu.memory_space<vmem>>, vector<8x1xf32>
    %44 = vector.broadcast %43 : vector<8x1xf32> to vector<8x64xf32>
    %45 = arith.addf %42, %44 : vector<8x64xf32>
    %c0_28 = arith.constant 0 : index
    %c0_29 = arith.constant 0 : index
    %46 = vector.load %arg8[%c0_28, %c0_29] : memref<8x64xf32, #tpu.memory_space<vmem>>, vector<8x64xf32>
    tpu.vector_store %arg8[%c0_28, %c0_29], %45 {strides = array<i32>} : memref<8x64xf32, #tpu.memory_space<vmem>>, vector<8x64xf32>,
    return
  }
  func.func @transform_0(%arg0: i32) -> (i32, i32) {
    %c0_i32 = arith.constant 0 : i32
    %c0_i32_0 = arith.constant 0 : i32
    return %arg0, %c0_i32 : i32, i32
  }
  func.func @transform_1(%arg0: i32) -> (i32, i32) {
    %c0_i32 = arith.constant 0 : i32
    %c0_i32_0 = arith.constant 0 : i32
    %c0_i32_1 = arith.constant 0 : i32
    return %c0_i32, %c0_i32_0 : i32, i32
  }
  func.func @transform_2(%arg0: i32) -> (i32, i32) {
    %c0_i32 = arith.constant 0 : i32
    %c0_i32_0 = arith.constant 0 : i32
    %c0_i32_1 = arith.constant 0 : i32
    return %c0_i32, %c0_i32_0 : i32, i32
  }
  func.func @transform_3(%arg0: i32) -> (i32, i32, i32) {
    %c0_i32 = arith.constant 0 : i32
    %c0_i32_0 = arith.constant 0 : i32
    %c0_i32_1 = arith.constant 0 : i32
    %c0_i32_2 = arith.constant 0 : i32
    return %c0_i32, %c0_i32_0, %c0_i32_1 : i32, i32, i32
  }
  func.func @transform_4(%arg0: i32) -> (i32, i32, i32) {
    %c0_i32 = arith.constant 0 : i32
    %c0_i32_0 = arith.constant 0 : i32
    %c0_i32_1 = arith.constant 0 : i32
    %c0_i32_2 = arith.constant 0 : i32
    return %c0_i32, %c0_i32_0, %c0_i32_1 : i32, i32, i32
  }
  func.func @transform_5(%arg0: i32) -> (i32, i32) {
    %c0_i32 = arith.constant 0 : i32
    %c0_i32_0 = arith.constant 0 : i32
    %c0_i32_1 = arith.constant 0 : i32
    return %c0_i32, %c0_i32_0 : i32, i32
  }
  func.func @transform_6(%arg0: i32) -> (i32, i32) {
    %c0_i32 = arith.constant 0 : i32
    %c0_i32_0 = arith.constant 0 : i32
    %c0_i32_1 = arith.constant 0 : i32
    return %c0_i32, %c0_i32_0 : i32, i32
  }
  func.func @transform_7(%arg0: i32) -> (i32, i32) {
    %c0_i32 = arith.constant 0 : i32
    %c0_i32_0 = arith.constant 0 : i32
    return %c0_i32, %arg0 : i32, i32
  }
}

</mosaic_0001>

<llo_original>
// kernel: tpu_custom_call.1
$region0: #{tpu_custom_call.1}
  #allocation0 [shape = 'u32[]', space=smem, size = 0x4, offset = 0x4, fixed_abs, tag = 'smem constant byte address 0x4 - core index']
  #allocation1 [shape = 'u32[144,128]{1,0:T(1,128)}', space=vmem, size = 0x12000, scoped, tag = 'internal scratch']
  %s0 = inlined_call_operand.vmem [shape: f32[64,2], index: 0, kind: input, shape index: {}]
  %s1 = inlined_call_operand.vmem [shape: f32[2,128], index: 1, kind: input, shape index: {}]
  %s2 = inlined_call_operand.vmem [shape: f32[1,128], index: 2, kind: input, shape index: {}]
  %s3 = inlined_call_operand.hbm [shape: f32[3,128,128], index: 3, kind: input, shape index: {}]
  %s4 = inlined_call_operand.vmem [shape: f32[3,1,128], index: 4, kind: input, shape index: {}]
  %s5 = inlined_call_operand.vmem [shape: f32[8,128], index: 5, kind: input, shape index: {}]
  %s6 = inlined_call_operand.vmem [shape: f32[8,1], index: 6, kind: input, shape index: {}]
  %s7 = inlined_call_operand.hbm [shape: f32[8,64], index: 7, kind: output, shape index: {}]
  %s8 = sld [smem:[#allocation0]]
  $region42: #{tpu_custom_call.1} parent=0
    _
  %s10 = ssub.s32 1, %s8
  %s11 = scalar_select 0, %s10, %s8
  $region1: #{tpu_custom_call.1} parent=0
    #allocation2 [shape = 'u8[196608]{0}', space=vmem, size = 0x30000, scoped, tag = 'input window, operand 3, single buffered']
    #allocation3 [shape = 's32[1]{0}', space=sflag, size = 0x4, scoped, tag = 'scoped memory for tpu_custom_call.1']
    #allocation4 [shape = 's32[1]{0}', space=sflag, size = 0x4, scoped, tag = 'scoped memory for tpu_custom_call.1']
    #allocation5 [shape = 'u8[4096]{0}', space=vmem, size = 0x1000, scoped, tag = 'output window, operand 0, single buffered']
    %12 = vsyncpa [#allocation3], 0
    %13 = vsyncpa [#allocation4], 0
    // Predicated region
    $region2: #{tpu_custom_call.1} parent=1 // pred_check
      _
    $region3: #{tpu_custom_call.1} parent=1 // pred_check_branch
      %15 = sbr.rel (0) target = $region5
    $region4: #{tpu_custom_call.1} parent=1 // pred_region
      _
    $region5: #{tpu_custom_call.1} parent=1 // pred_fallthru
      _
    // Predicated region
    $region6: #{tpu_custom_call.1} parent=1 // pred_check
      _
    $region7: #{tpu_custom_call.1} parent=1 // pred_check_branch
      %17 = sbr.rel (0) target = $region9
    $region8: #{tpu_custom_call.1} parent=1 // pred_region
      _
    $region9: #{tpu_custom_call.1} parent=1 // pred_fallthru
      _
    // Predicated region
    $region10: #{tpu_custom_call.1} parent=1 // pred_check
      _
    $region11: #{tpu_custom_call.1} parent=1 // pred_check_branch
      %19 = sbr.rel (0) target = $region13
    $region12: #{tpu_custom_call.1} parent=1 // pred_region
      _
    $region13: #{tpu_custom_call.1} parent=1 // pred_fallthru
      _
    // Predicated region
    $region14: #{tpu_custom_call.1} parent=1 // pred_check
      _
    $region15: #{tpu_custom_call.1} parent=1 // pred_check_branch
      %21 = sbr.rel (0) target = $region17
    $region16: #{tpu_custom_call.1} parent=1 // pred_region
      %s23 = ssub.s32 6144, 6144
      %24 = vsyncadd [#allocation3], %s23
      %s25 = sshll.u32 [#allocation2], 4
      %s26 = int_to_ptr.vmem [resolvable:$true] %s25
      %31 = dma.hbm_to_vmem [thread:$0]  %s3, 6144, %s26, [#allocation3], 128, 128, 8
    $region17: #{tpu_custom_call.1} parent=1 // pred_fallthru
      _
    // Predicated region
    $region18: #{tpu_custom_call.1} parent=1 // pred_check
      _
    $region19: #{tpu_custom_call.1} parent=1 // pred_check_branch
      %33 = sbr.rel (0) target = $region21
    $region20: #{tpu_custom_call.1} parent=1 // pred_region
      _
    $region21: #{tpu_custom_call.1} parent=1 // pred_fallthru
      _
    // Predicated region
    $region22: #{tpu_custom_call.1} parent=1 // pred_check
      _
    $region23: #{tpu_custom_call.1} parent=1 // pred_check_branch
      %35 = sbr.rel (0) target = $region25
    $region24: #{tpu_custom_call.1} parent=1 // pred_region
      _
    $region25: #{tpu_custom_call.1} parent=1 // pred_fallthru
      _
    // Predicated region
    $region26: #{tpu_custom_call.1} parent=1 // pred_check
      _
    $region27: #{tpu_custom_call.1} parent=1 // pred_check_branch
      %37 = sbr.rel (0) target = $region29
    $region28: #{tpu_custom_call.1} parent=1 // pred_region
      _
    $region29: #{tpu_custom_call.1} parent=1 // pred_fallthru
      _
    // Predicated region
    $region30: #{tpu_custom_call.1} parent=1 // pred_check
      _
    $region31: #{tpu_custom_call.1} parent=1 // pred_check_branch
      %39 = sbr.rel (0) target = $region33
    $region32: #{tpu_custom_call.1} parent=1 // pred_region
      %40 = dma.done [#allocation3], 6144
    $region33: #{tpu_custom_call.1} parent=1 // pred_fallthru
      _
    %v41 = vld [vmem:[%s0] sm:$0xff]
    %v42 = vld [vmem:[%s0 + $0x8] sm:$0xff]
    %v43 = vld [vmem:[%s0 + $0x10] sm:$0xff]
    %v44 = vld [vmem:[%s0 + $0x18] sm:$0xff]
    %v45 = vld [vmem:[%s0 + $0x20] sm:$0xff]
    %v46 = vld [vmem:[%s0 + $0x28] sm:$0xff]
    %v47 = vld [vmem:[%s0 + $0x30] sm:$0xff]
    %v48 = vld [vmem:[%s0 + $0x38] sm:$0xff]
    %v49 = vld [vmem:[%s1] sm:$0x3]
    %v50 = vld [vmem:[%s2] sm:$0x1]
    %52 = vset.pattern.permute.xlu0 0
    %53 = vperm.xlu0 %52, %v41
    %v54 = vpop.permute.xlu0 %53
    %57 = vset.pattern.permute.xlu0 0
    %58 = vperm.xlu0 %57, %v42
    %v59 = vpop.permute.xlu0 %58
    %62 = vset.pattern.permute.xlu0 0
    %63 = vperm.xlu0 %62, %v43
    %v64 = vpop.permute.xlu0 %63
    %67 = vset.pattern.permute.xlu0 0
    %68 = vperm.xlu0 %67, %v44
    %v69 = vpop.permute.xlu0 %68
    %72 = vset.pattern.permute.xlu0 0
    %73 = vperm.xlu0 %72, %v45
    %v74 = vpop.permute.xlu0 %73
    %77 = vset.pattern.permute.xlu0 0
    %78 = vperm.xlu0 %77, %v46
    %v79 = vpop.permute.xlu0 %78
    %82 = vset.pattern.permute.xlu0 0
    %83 = vperm.xlu0 %82, %v47
    %v84 = vpop.permute.xlu0 %83
    %87 = vset.pattern.permute.xlu0 0
    %88 = vperm.xlu0 %87, %v48
    %v89 = vpop.permute.xlu0 %88
    %v91 = vlaneseq
    %v92 = vshrl.u32 %v91, 7
    %v93 = vsub.s32 0, %v92
    %v94 = vrot.slane %v49, %v93
    %v95 = vmul.f32 %v54, %v94
    %v96 = vmul.f32 %v59, %v94
    %v97 = vmul.f32 %v64, %v94
    %v98 = vmul.f32 %v69, %v94
    %v99 = vmul.f32 %v74, %v94
    %v100 = vmul.f32 %v79, %v94
    %v101 = vmul.f32 %v84, %v94
    %v102 = vmul.f32 %v89, %v94
    %v104 = vlaneseq
    %v105 = vshrl.u32 %v104, 7
    %v106 = vsub.s32 0, %v105
    %v107 = vrot.slane %v50, %v106
    %v109 = vadd.f32 %v107, %v95
    %v110 = vadd.f32 %v107, %v96
    %v111 = vadd.f32 %v107, %v97
    %v112 = vadd.f32 %v107, %v98
    %v113 = vadd.f32 %v107, %v99
    %v114 = vadd.f32 %v107, %v100
    %v115 = vadd.f32 %v107, %v101
    %v116 = vadd.f32 %v107, %v102
    %117 = vset.pattern.permute.xlu0 1
    %118 = vperm.xlu0 %117, %v41
    %v119 = vpop.permute.xlu0 %118
    %121 = vset.pattern.permute.xlu0 1
    %122 = vperm.xlu0 %121, %v42
    %v123 = vpop.permute.xlu0 %122
    %125 = vset.pattern.permute.xlu0 1
    %126 = vperm.xlu0 %125, %v43
    %v127 = vpop.permute.xlu0 %126
    %129 = vset.pattern.permute.xlu0 1
    %130 = vperm.xlu0 %129, %v44
    %v131 = vpop.permute.xlu0 %130
    %133 = vset.pattern.permute.xlu0 1
    %134 = vperm.xlu0 %133, %v45
    %v135 = vpop.permute.xlu0 %134
    %137 = vset.pattern.permute.xlu0 1
    %138 = vperm.xlu0 %137, %v46
    %v139 = vpop.permute.xlu0 %138
    %141 = vset.pattern.permute.xlu0 1
    %142 = vperm.xlu0 %141, %v47
    %v143 = vpop.permute.xlu0 %142
    %145 = vset.pattern.permute.xlu0 1
    %146 = vperm.xlu0 %145, %v48
    %v147 = vpop.permute.xlu0 %146
    %v149 = vlaneseq
    %v150 = vshrl.u32 %v149, 7
    %v151 = vsub.s32 1, %v150
    %v152 = vrot.slane %v49, %v151
    %v153 = vmul.f32 %v119, %v152
    %v154 = vmul.f32 %v123, %v152
    %v155 = vmul.f32 %v127, %v152
    %v156 = vmul.f32 %v131, %v152
    %v157 = vmul.f32 %v135, %v152
    %v158 = vmul.f32 %v139, %v152
    %v159 = vmul.f32 %v143, %v152
    %v160 = vmul.f32 %v147, %v152
    %v161 = vadd.f32 %v109, %v153
    %v162 = vadd.f32 %v110, %v154
    %v163 = vadd.f32 %v111, %v155
    %v164 = vadd.f32 %v112, %v156
    %v165 = vadd.f32 %v113, %v157
    %v166 = vadd.f32 %v114, %v158
    %v167 = vadd.f32 %v115, %v159
    %v168 = vadd.f32 %v116, %v160
    %v169 = vtanh.pop %v161
    %v170 = vtanh.pop %v162
    %v171 = vtanh.pop %v163
    %v172 = vtanh.pop %v164
    %v173 = vtanh.pop %v165
    %v174 = vtanh.pop %v166
    %v175 = vtanh.pop %v167
    %v176 = vtanh.pop %v168
    %v177 = vld [vmem:[#allocation2] sm:$0xff]
    %v178 = vld [vmem:[#allocation2 + $0x8] sm:$0xff]
    %v179 = vld [vmem:[#allocation2 + $0x10] sm:$0xff]
    %v180 = vld [vmem:[#allocation2 + $0x18] sm:$0xff]
    %v181 = vld [vmem:[#allocation2 + $0x20] sm:$0xff]
    %v182 = vld [vmem:[#allocation2 + $0x28] sm:$0xff]
    %v183 = vld [vmem:[#allocation2 + $0x30] sm:$0xff]
    %v184 = vld [vmem:[#allocation2 + $0x38] sm:$0xff]
    %v185 = vld [vmem:[#allocation2 + $0x40] sm:$0xff]
    %v186 = vld [vmem:[#allocation2 + $0x48] sm:$0xff]
    %v187 = vld [vmem:[#allocation2 + $0x50] sm:$0xff]
    %v188 = vld [vmem:[#allocation2 + $0x58] sm:$0xff]
    %v189 = vld [vmem:[#allocation2 + $0x60] sm:$0xff]
    %v190 = vld [vmem:[#allocation2 + $0x68] sm:$0xff]
    %v191 = vld [vmem:[#allocation2 + $0x70] sm:$0xff]
    %v192 = vld [vmem:[#allocation2 + $0x78] sm:$0xff]
    %v193 = vld [vmem:[%s4] sm:$0x1]
    %v195 = vlaneseq
    %v196 = vshrl.u32 %v195, 7
    %v197 = vsub.s32 0, %v196
    %v198 = vrot.slane %v193, %v197
    %200 = vmatprep.subr.mxu0 0.0
    %201 = vmatpush1.msra.mxu0 %v192
    %202 = vmatprep.subr.mxu0 0.0
    %203 = vmatpush1.msra.mxu0 %v191
    %204 = vmatprep.subr.mxu0 0.0
    %205 = vmatpush1.msra.mxu0 %v190
    %206 = vmatprep.subr.mxu0 0.0
    %207 = vmatpush1.msra.mxu0 %v189
    %208 = vmatprep.subr.mxu0 0.0
    %209 = vmatpush1.msra.mxu0 %v188
    %210 = vmatprep.subr.mxu0 0.0
    %211 = vmatpush1.msra.mxu0 %v187
    %212 = vmatprep.subr.mxu0 0.0
    %213 = vmatpush1.msra.mxu0 %v186
    %214 = vmatprep.subr.mxu0 0.0
    %215 = vmatpush1.msra.mxu0 %v185
    %216 = vmatprep.subr.mxu0 0.0
    %217 = vmatpush1.msra.mxu0 %v184
    %218 = vmatprep.subr.mxu0 0.0
    %219 = vmatpush1.msra.mxu0 %v183
    %220 = vmatprep.subr.mxu0 0.0
    %221 = vmatpush1.msra.mxu0 %v182
    %222 = vmatprep.subr.mxu0 0.0
    %223 = vmatpush1.msra.mxu0 %v181
    %224 = vmatprep.subr.mxu0 0.0
    %225 = vmatpush1.msra.mxu0 %v180
    %226 = vmatprep.subr.mxu0 0.0
    %227 = vmatpush1.msra.mxu0 %v179
    %228 = vmatprep.subr.mxu0 0.0
    %229 = vmatpush1.msra.mxu0 %v178
    %230 = vmatprep.subr.mxu0 0.0
    %231 = vmatpush1.msra.mxu0 %v177
    %232 = vmatprep.subr.mxu0 0.0
    %233 = vmatpush2.msra.mxu0 0.0
    %234 = vmatprep.subr.mxu0 0.0
    %235 = vmatpush2.msra.mxu0 0.0
    %236 = vmatprep.subr.mxu0 0.0
    %237 = vmatpush2.msra.mxu0 0.0
    %238 = vmatprep.subr.mxu0 0.0
    %239 = vmatpush2.msra.mxu0 0.0
    %240 = vmatprep.subr.mxu0 0.0
    %241 = vmatpush2.msra.mxu0 0.0
    %242 = vmatprep.subr.mxu0 0.0
    %243 = vmatpush2.msra.mxu0 0.0
    %244 = vmatprep.subr.mxu0 0.0
    %245 = vmatpush2.msra.mxu0 0.0
    %246 = vmatprep.subr.mxu0 0.0
    %247 = vmatpush2.msra.mxu0 0.0
    %248 = vmatprep.subr.mxu0 0.0
    %249 = vmatpush2.msra.mxu0 0.0
    %250 = vmatprep.subr.mxu0 0.0
    %251 = vmatpush2.msra.mxu0 0.0
    %252 = vmatprep.subr.mxu0 0.0
    %253 = vmatpush2.msra.mxu0 0.0
    %254 = vmatprep.subr.mxu0 0.0
    %255 = vmatpush2.msra.mxu0 0.0
    %256 = vmatprep.subr.mxu0 0.0
    %257 = vmatpush2.msra.mxu0 0.0
    %258 = vmatprep.subr.mxu0 0.0
    %259 = vmatpush2.msra.mxu0 0.0
    %260 = vmatprep.subr.mxu0 0.0
    %261 = vmatpush2.msra.mxu0 0.0
    %262 = vmatprep.subr.mxu0 0.0
    %263 = vmatpush2.msra.mxu0 0.0
    %264 = vmatprep.mubr.f32.mxu0 0.0
    %265 = vmatmul.mubr.f32.gmra.mxu0 %v169
    %v266 = vpop.f32.mrf.mxu0
    %v267 = vadd.f32 %v198, %v266
    %v268 = vpop.f32.mrf.mxu0
    %269 = vmatprep.mubr.f32.mxu0 0.0
    %270 = vmatmul.mubr.f32.gmra.mxu0 %v170
    %v271 = vpop.f32.mrf.mxu0
    %v272 = vadd.f32 %v198, %v271
    %v273 = vpop.f32.mrf.mxu0
    %274 = vmatprep.mubr.f32.mxu0 0.0
    %275 = vmatmul.mubr.f32.gmra.mxu0 %v171
    %v276 = vpop.f32.mrf.mxu0
    %v277 = vadd.f32 %v198, %v276
    %v278 = vpop.f32.mrf.mxu0
    %279 = vmatprep.mubr.f32.mxu0 0.0
    %280 = vmatmul.mubr.f32.gmra.mxu0 %v172
    %v281 = vpop.f32.mrf.mxu0
    %v282 = vadd.f32 %v198, %v281
    %v283 = vpop.f32.mrf.mxu0
    %284 = vmatprep.mubr.f32.mxu0 0.0
    %285 = vmatmul.mubr.f32.gmra.mxu0 %v173
    %v286 = vpop.f32.mrf.mxu0
    %v287 = vadd.f32 %v198, %v286
    %v288 = vpop.f32.mrf.mxu0
    %289 = vmatprep.mubr.f32.mxu0 0.0
    %290 = vmatmul.mubr.f32.gmra.mxu0 %v174
    %v291 = vpop.f32.mrf.mxu0
    %v292 = vadd.f32 %v198, %v291
    %v293 = vpop.f32.mrf.mxu0
    %294 = vmatprep.mubr.f32.mxu0 0.0
    %295 = vmatmul.mubr.f32.gmra.mxu0 %v175
    %v296 = vpop.f32.mrf.mxu0
    %v297 = vadd.f32 %v198, %v296
    %v298 = vpop.f32.mrf.mxu0
    %299 = vmatprep.mubr.f32.mxu0 0.0
    %300 = vmatmul.mubr.f32.gmra.mxu0 %v176
    %v301 = vpop.f32.mrf.mxu0
    %v302 = vadd.f32 %v198, %v301
    %v303 = vpop.f32.mrf.mxu0
    %304 = vdwg.mxu0
    %v305 = vtanh.pop %v267
    %v306 = vtanh.pop %v272
    %v307 = vtanh.pop %v277
    %v308 = vtanh.pop %v282
    %v309 = vtanh.pop %v287
    %v310 = vtanh.pop %v292
    %v311 = vtanh.pop %v297
    %v312 = vtanh.pop %v302
    %s313 = scalar_lea.vmem [#allocation2], 128
    %v314 = vld [vmem:[%s313] sm:$0xff]
    %v315 = vld [vmem:[%s313 + $0x8] sm:$0xff]
    %v316 = vld [vmem:[%s313 + $0x10] sm:$0xff]
    %v317 = vld [vmem:[%s313 + $0x18] sm:$0xff]
    %v318 = vld [vmem:[%s313 + $0x20] sm:$0xff]
    %v319 = vld [vmem:[%s313 + $0x28] sm:$0xff]
    %v320 = vld [vmem:[%s313 + $0x30] sm:$0xff]
    %v321 = vld [vmem:[%s313 + $0x38] sm:$0xff]
    %v322 = vld [vmem:[%s313 + $0x40] sm:$0xff]
    %v323 = vld [vmem:[%s313 + $0x48] sm:$0xff]
    %v324 = vld [vmem:[%s313 + $0x50] sm:$0xff]
    %v325 = vld [vmem:[%s313 + $0x58] sm:$0xff]
    %v326 = vld [vmem:[%s313 + $0x60] sm:$0xff]
    %v327 = vld [vmem:[%s313 + $0x68] sm:$0xff]
    %v328 = vld [vmem:[%s313 + $0x70] sm:$0xff]
    %v329 = vld [vmem:[%s313 + $0x78] sm:$0xff]
    %s330 = scalar_lea.vmem %s4, 1
    %v331 = vld [vmem:[%s330] sm:$0x1]
    %v333 = vlaneseq
    %v334 = vshrl.u32 %v333, 7
    %v335 = vsub.s32 0, %v334
    %v336 = vrot.slane %v331, %v335
    %338 = vmatprep.subr.mxu0 0.0
    %339 = vmatpush1.msra.mxu0 %v329
    %340 = vmatprep.subr.mxu0 0.0
    %341 = vmatpush1.msra.mxu0 %v328
    %342 = vmatprep.subr.mxu0 0.0
    %343 = vmatpush1.msra.mxu0 %v327
    %344 = vmatprep.subr.mxu0 0.0
    %345 = vmatpush1.msra.mxu0 %v326
    %346 = vmatprep.subr.mxu0 0.0
    %347 = vmatpush1.msra.mxu0 %v325
    %348 = vmatprep.subr.mxu0 0.0
    %349 = vmatpush1.msra.mxu0 %v324
    %350 = vmatprep.subr.mxu0 0.0
    %351 = vmatpush1.msra.mxu0 %v323
    %352 = vmatprep.subr.mxu0 0.0
    %353 = vmatpush1.msra.mxu0 %v322
    %354 = vmatprep.subr.mxu0 0.0
    %355 = vmatpush1.msra.mxu0 %v321
    %356 = vmatprep.subr.mxu0 0.0
    %357 = vmatpush1.msra.mxu0 %v320
    %358 = vmatprep.subr.mxu0 0.0
    %359 = vmatpush1.msra.mxu0 %v319
    %360 = vmatprep.subr.mxu0 0.0
    %361 = vmatpush1.msra.mxu0 %v318
    %362 = vmatprep.subr.mxu0 0.0
    %363 = vmatpush1.msra.mxu0 %v317
    %364 = vmatprep.subr.mxu0 0.0
    %365 = vmatpush1.msra.mxu0 %v316
    %366 = vmatprep.subr.mxu0 0.0
    %367 = vmatpush1.msra.mxu0 %v315
    %368 = vmatprep.subr.mxu0 0.0
    %369 = vmatpush1.msra.mxu0 %v314
    %370 = vmatprep.subr.mxu0 0.0
    %371 = vmatpush2.msra.mxu0 0.0
    %372 = vmatprep.subr.mxu0 0.0
    %373 = vmatpush2.msra.mxu0 0.0
    %374 = vmatprep.subr.mxu0 0.0
    %375 = vmatpush2.msra.mxu0 0.0
    %376 = vmatprep.subr.mxu0 0.0
    %377 = vmatpush2.msra.mxu0 0.0
    %378 = vmatprep.subr.mxu0 0.0
    %379 = vmatpush2.msra.mxu0 0.0
    %380 = vmatprep.subr.mxu0 0.0
    %381 = vmatpush2.msra.mxu0 0.0
    %382 = vmatprep.subr.mxu0 0.0
    %383 = vmatpush2.msra.mxu0 0.0
    %384 = vmatprep.subr.mxu0 0.0
    %385 = vmatpush2.msra.mxu0 0.0
    %386 = vmatprep.subr.mxu0 0.0
    %387 = vmatpush2.msra.mxu0 0.0
    %388 = vmatprep.subr.mxu0 0.0
    %389 = vmatpush2.msra.mxu0 0.0
    %390 = vmatprep.subr.mxu0 0.0
    %391 = vmatpush2.msra.mxu0 0.0
    %392 = vmatprep.subr.mxu0 0.0
    %393 = vmatpush2.msra.mxu0 0.0
    %394 = vmatprep.subr.mxu0 0.0
    %395 = vmatpush2.msra.mxu0 0.0
    %396 = vmatprep.subr.mxu0 0.0
    %397 = vmatpush2.msra.mxu0 0.0
    %398 = vmatprep.subr.mxu0 0.0
    %399 = vmatpush2.msra.mxu0 0.0
    %400 = vmatprep.subr.mxu0 0.0
    %401 = vmatpush2.msra.mxu0 0.0
    %402 = vmatprep.mubr.f32.mxu0 0.0
    %403 = vmatmul.mubr.f32.gmra.mxu0 %v305
    %v404 = vpop.f32.mrf.mxu0
    %v405 = vadd.f32 %v336, %v404
    %v406 = vpop.f32.mrf.mxu0
    %407 = vmatprep.mubr.f32.mxu0 0.0
    %408 = vmatmul.mubr.f32.gmra.mxu0 %v306
    %v409 = vpop.f32.mrf.mxu0
    %v410 = vadd.f32 %v336, %v409
    %v411 = vpop.f32.mrf.mxu0
    %412 = vmatprep.mubr.f32.mxu0 0.0
    %413 = vmatmul.mubr.f32.gmra.mxu0 %v307
    %v414 = vpop.f32.mrf.mxu0
    %v415 = vadd.f32 %v336, %v414
    %v416 = vpop.f32.mrf.mxu0
    %417 = vmatprep.mubr.f32.mxu0 0.0
    %418 = vmatmul.mubr.f32.gmra.mxu0 %v308
    %v419 = vpop.f32.mrf.mxu0
    %v420 = vadd.f32 %v336, %v419
    %v421 = vpop.f32.mrf.mxu0
    %422 = vmatprep.mubr.f32.mxu0 0.0
    %423 = vmatmul.mubr.f32.gmra.mxu0 %v309
    %v424 = vpop.f32.mrf.mxu0
    %v425 = vadd.f32 %v336, %v424
    %v426 = vpop.f32.mrf.mxu0
    %427 = vmatprep.mubr.f32.mxu0 0.0
    %428 = vmatmul.mubr.f32.gmra.mxu0 %v310
    %v429 = vpop.f32.mrf.mxu0
    %v430 = vadd.f32 %v336, %v429
    %v431 = vpop.f32.mrf.mxu0
    %432 = vmatprep.mubr.f32.mxu0 0.0
    %433 = vmatmul.mubr.f32.gmra.mxu0 %v311
    %v434 = vpop.f32.mrf.mxu0
    %v435 = vadd.f32 %v336, %v434
    %v436 = vpop.f32.mrf.mxu0
    %437 = vmatprep.mubr.f32.mxu0 0.0
    %438 = vmatmul.mubr.f32.gmra.mxu0 %v312
    %v439 = vpop.f32.mrf.mxu0
    %v440 = vadd.f32 %v336, %v439
    %v441 = vpop.f32.mrf.mxu0
    %442 = vdwg.mxu0
    %v443 = vtanh.pop %v405
    %v444 = vtanh.pop %v410
    %v445 = vtanh.pop %v415
    %v446 = vtanh.pop %v420
    %v447 = vtanh.pop %v425
    %v448 = vtanh.pop %v430
    %v449 = vtanh.pop %v435
    %v450 = vtanh.pop %v440
    %s451 = scalar_lea.vmem [#allocation2], 256
    %v452 = vld [vmem:[%s451] sm:$0xff]
    %v453 = vld [vmem:[%s451 + $0x8] sm:$0xff]
    %v454 = vld [vmem:[%s451 + $0x10] sm:$0xff]
    %v455 = vld [vmem:[%s451 + $0x18] sm:$0xff]
    %v456 = vld [vmem:[%s451 + $0x20] sm:$0xff]
    %v457 = vld [vmem:[%s451 + $0x28] sm:$0xff]
    %v458 = vld [vmem:[%s451 + $0x30] sm:$0xff]
    %v459 = vld [vmem:[%s451 + $0x38] sm:$0xff]
    %v460 = vld [vmem:[%s451 + $0x40] sm:$0xff]
    %v461 = vld [vmem:[%s451 + $0x48] sm:$0xff]
    %v462 = vld [vmem:[%s451 + $0x50] sm:$0xff]
    %v463 = vld [vmem:[%s451 + $0x58] sm:$0xff]
    %v464 = vld [vmem:[%s451 + $0x60] sm:$0xff]
    %v465 = vld [vmem:[%s451 + $0x68] sm:$0xff]
    %v466 = vld [vmem:[%s451 + $0x70] sm:$0xff]
    %v467 = vld [vmem:[%s451 + $0x78] sm:$0xff]
    %s468 = scalar_lea.vmem %s4, 2
    %v469 = vld [vmem:[%s468] sm:$0x1]
    %v471 = vlaneseq
    %v472 = vshrl.u32 %v471, 7
    %v473 = vsub.s32 0, %v472
    %v474 = vrot.slane %v469, %v473
    %476 = vmatprep.subr.mxu0 0.0
    %477 = vmatpush1.msra.mxu0 %v467
    %478 = vmatprep.subr.mxu0 0.0
    %479 = vmatpush1.msra.mxu0 %v466
    %480 = vmatprep.subr.mxu0 0.0
    %481 = vmatpush1.msra.mxu0 %v465
    %482 = vmatprep.subr.mxu0 0.0
    %483 = vmatpush1.msra.mxu0 %v464
    %484 = vmatprep.subr.mxu0 0.0
    %485 = vmatpush1.msra.mxu0 %v463
    %486 = vmatprep.subr.mxu0 0.0
    %487 = vmatpush1.msra.mxu0 %v462
    %488 = vmatprep.subr.mxu0 0.0
    %489 = vmatpush1.msra.mxu0 %v461
    %490 = vmatprep.subr.mxu0 0.0
    %491 = vmatpush1.msra.mxu0 %v460
    %492 = vmatprep.subr.mxu0 0.0
    %493 = vmatpush1.msra.mxu0 %v459
    %494 = vmatprep.subr.mxu0 0.0
    %495 = vmatpush1.msra.mxu0 %v458
    %496 = vmatprep.subr.mxu0 0.0
    %497 = vmatpush1.msra.mxu0 %v457
    %498 = vmatprep.subr.mxu0 0.0
    %499 = vmatpush1.msra.mxu0 %v456
    %500 = vmatprep.subr.mxu0 0.0
    %501 = vmatpush1.msra.mxu0 %v455
    %502 = vmatprep.subr.mxu0 0.0
    %503 = vmatpush1.msra.mxu0 %v454
    %504 = vmatprep.subr.mxu0 0.0
    %505 = vmatpush1.msra.mxu0 %v453
    %506 = vmatprep.subr.mxu0 0.0
    %507 = vmatpush1.msra.mxu0 %v452
    %508 = vmatprep.subr.mxu0 0.0
    %509 = vmatpush2.msra.mxu0 0.0
    %510 = vmatprep.subr.mxu0 0.0
    %511 = vmatpush2.msra.mxu0 0.0
    %512 = vmatprep.subr.mxu0 0.0
    %513 = vmatpush2.msra.mxu0 0.0
    %514 = vmatprep.subr.mxu0 0.0
    %515 = vmatpush2.msra.mxu0 0.0
    %516 = vmatprep.subr.mxu0 0.0
    %517 = vmatpush2.msra.mxu0 0.0
    %518 = vmatprep.subr.mxu0 0.0
    %519 = vmatpush2.msra.mxu0 0.0
    %520 = vmatprep.subr.mxu0 0.0
    %521 = vmatpush2.msra.mxu0 0.0
    %522 = vmatprep.subr.mxu0 0.0
    %523 = vmatpush2.msra.mxu0 0.0
    %524 = vmatprep.subr.mxu0 0.0
    %525 = vmatpush2.msra.mxu0 0.0
    %526 = vmatprep.subr.mxu0 0.0
    %527 = vmatpush2.msra.mxu0 0.0
    %528 = vmatprep.subr.mxu0 0.0
    %529 = vmatpush2.msra.mxu0 0.0
    %530 = vmatprep.subr.mxu0 0.0
    %531 = vmatpush2.msra.mxu0 0.0
    %532 = vmatprep.subr.mxu0 0.0
    %533 = vmatpush2.msra.mxu0 0.0
    %534 = vmatprep.subr.mxu0 0.0
    %535 = vmatpush2.msra.mxu0 0.0
    %536 = vmatprep.subr.mxu0 0.0
    %537 = vmatpush2.msra.mxu0 0.0
    %538 = vmatprep.subr.mxu0 0.0
    %539 = vmatpush2.msra.mxu0 0.0
    %540 = vmatprep.mubr.f32.mxu0 0.0
    %541 = vmatmul.mubr.f32.gmra.mxu0 %v443
    %v542 = vpop.f32.mrf.mxu0
    %v543 = vadd.f32 %v474, %v542
    %v544 = vpop.f32.mrf.mxu0
    %545 = vmatprep.mubr.f32.mxu0 0.0
    %546 = vmatmul.mubr.f32.gmra.mxu0 %v444
    %v547 = vpop.f32.mrf.mxu0
    %v548 = vadd.f32 %v474, %v547
    %v549 = vpop.f32.mrf.mxu0
    %550 = vmatprep.mubr.f32.mxu0 0.0
    %551 = vmatmul.mubr.f32.gmra.mxu0 %v445
    %v552 = vpop.f32.mrf.mxu0
    %v553 = vadd.f32 %v474, %v552
    %v554 = vpop.f32.mrf.mxu0
    %555 = vmatprep.mubr.f32.mxu0 0.0
    %556 = vmatmul.mubr.f32.gmra.mxu0 %v446
    %v557 = vpop.f32.mrf.mxu0
    %v558 = vadd.f32 %v474, %v557
    %v559 = vpop.f32.mrf.mxu0
    %560 = vmatprep.mubr.f32.mxu0 0.0
    %561 = vmatmul.mubr.f32.gmra.mxu0 %v447
    %v562 = vpop.f32.mrf.mxu0
    %v563 = vadd.f32 %v474, %v562
    %v564 = vpop.f32.mrf.mxu0
    %565 = vmatprep.mubr.f32.mxu0 0.0
    %566 = vmatmul.mubr.f32.gmra.mxu0 %v448
    %v567 = vpop.f32.mrf.mxu0
    %v568 = vadd.f32 %v474, %v567
    %v569 = vpop.f32.mrf.mxu0
    %570 = vmatprep.mubr.f32.mxu0 0.0
    %571 = vmatmul.mubr.f32.gmra.mxu0 %v449
    %v572 = vpop.f32.mrf.mxu0
    %v573 = vadd.f32 %v474, %v572
    %v574 = vpop.f32.mrf.mxu0
    %575 = vmatprep.mubr.f32.mxu0 0.0
    %576 = vmatmul.mubr.f32.gmra.mxu0 %v450
    %v577 = vpop.f32.mrf.mxu0
    %v578 = vadd.f32 %v474, %v577
    %v579 = vpop.f32.mrf.mxu0
    %580 = vdwg.mxu0
    %v581 = vtanh.pop %v543
    %v582 = vtanh.pop %v548
    %v583 = vtanh.pop %v553
    %v584 = vtanh.pop %v558
    %v585 = vtanh.pop %v563
    %v586 = vtanh.pop %v568
    %v587 = vtanh.pop %v573
    %v588 = vtanh.pop %v578
    %v589 = vld [vmem:[%s5] sm:$0xff]
    %v590 = vld [vmem:[%s6] sm:$0xff]
    %592 = vset.pattern.permute.xlu0 0
    %593 = vperm.xlu0 %592, %v590
    %v594 = vpop.permute.xlu0 %593
    %596 = vmatprep.subr.mxu0 0.0
    %597 = vmatpush1.xpose.msra.mxu0 0.0
    %598 = vmatprep.subr.mxu0 0.0
    %599 = vmatpush1.xpose.msra.mxu0 0.0
    %600 = vmatprep.subr.mxu0 0.0
    %601 = vmatpush1.xpose.msra.mxu0 0.0
    %602 = vmatprep.subr.mxu0 0.0
    %603 = vmatpush1.xpose.msra.mxu0 0.0
    %604 = vmatprep.subr.mxu0 0.0
    %605 = vmatpush1.xpose.msra.mxu0 0.0
    %606 = vmatprep.subr.mxu0 0.0
    %607 = vmatpush1.xpose.msra.mxu0 0.0
    %608 = vmatprep.subr.mxu0 0.0
    %609 = vmatpush1.xpose.msra.mxu0 0.0
    %610 = vmatprep.subr.mxu0 0.0
    %611 = vmatpush1.xpose.msra.mxu0 0.0
    %612 = vmatprep.subr.mxu0 0.0
    %613 = vmatpush1.xpose.msra.mxu0 %v588
    %614 = vmatprep.subr.mxu0 0.0
    %615 = vmatpush1.xpose.msra.mxu0 %v587
    %616 = vmatprep.subr.mxu0 0.0
    %617 = vmatpush1.xpose.msra.mxu0 %v586
    %618 = vmatprep.subr.mxu0 0.0
    %619 = vmatpush1.xpose.msra.mxu0 %v585
    %620 = vmatprep.subr.mxu0 0.0
    %621 = vmatpush1.xpose.msra.mxu0 %v584
    %622 = vmatprep.subr.mxu0 0.0
    %623 = vmatpush1.xpose.msra.mxu0 %v583
    %624 = vmatprep.subr.mxu0 0.0
    %625 = vmatpush1.xpose.msra.mxu0 %v582
    %626 = vmatprep.subr.mxu0 0.0
    %627 = vmatpush1.xpose.msra.mxu0 %v581
    %628 = vmatprep.subr.mxu0 0.0
    %629 = vmatpush2.xpose.msra.mxu0 0.0
    %630 = vmatprep.subr.mxu0 0.0
    %631 = vmatpush2.xpose.msra.mxu0 0.0
    %632 = vmatprep.subr.mxu0 0.0
    %633 = vmatpush2.xpose.msra.mxu0 0.0
    %634 = vmatprep.subr.mxu0 0.0
    %635 = vmatpush2.xpose.msra.mxu0 0.0
    %636 = vmatprep.subr.mxu0 0.0
    %637 = vmatpush2.xpose.msra.mxu0 0.0
    %638 = vmatprep.subr.mxu0 0.0
    %639 = vmatpush2.xpose.msra.mxu0 0.0
    %640 = vmatprep.subr.mxu0 0.0
    %641 = vmatpush2.xpose.msra.mxu0 0.0
    %642 = vmatprep.subr.mxu0 0.0
    %643 = vmatpush2.xpose.msra.mxu0 0.0
    %644 = vmatprep.subr.mxu0 0.0
    %645 = vmatpush2.xpose.msra.mxu0 0.0
    %646 = vmatprep.subr.mxu0 0.0
    %647 = vmatpush2.xpose.msra.mxu0 0.0
    %648 = vmatprep.subr.mxu0 0.0
    %649 = vmatpush2.xpose.msra.mxu0 0.0
    %650 = vmatprep.subr.mxu0 0.0
    %651 = vmatpush2.xpose.msra.mxu0 0.0
    %652 = vmatprep.subr.mxu0 0.0
    %653 = vmatpush2.xpose.msra.mxu0 0.0
    %654 = vmatprep.subr.mxu0 0.0
    %655 = vmatpush2.xpose.msra.mxu0 0.0
    %656 = vmatprep.subr.mxu0 0.0
    %657 = vmatpush2.xpose.msra.mxu0 0.0
    %658 = vmatprep.subr.mxu0 0.0
    %659 = vmatpush2.xpose.msra.mxu0 0.0
    %660 = vmatprep.mubr.f32.mxu0 0.0
    %661 = vmatmul.mubr.f32.gmra.mxu0 %v589
    %v662 = vpop.f32.mrf.mxu0
    %v663 = vadd.f32 %v594, %v662
    %v664 = vpop.f32.mrf.mxu0
    %665 = vdwg.mxu0
    %vm666 = vcmask 523264
    %667 = vst.msk [vmem:[#allocation5] sm:$0xff] %vm666, %v663
    // Predicated region
    $region34: #{tpu_custom_call.1} parent=1 // pred_check
      _
    $region35: #{tpu_custom_call.1} parent=1 // pred_check_branch
      %669 = sbr.rel (0) target = $region37
    $region36: #{tpu_custom_call.1} parent=1 // pred_region
      %s671 = ssub.s32 128, 128
      %672 = vsyncadd [#allocation4], %s671
      %s674 = sshll.u32 [#allocation5], 4
      %s675 = int_to_ptr.vmem [resolvable:$true] %s674
      %677 = dma.vmem_to_hbm [thread:$0]  %s675, 128, %s7, [#allocation4]
    $region37: #{tpu_custom_call.1} parent=1 // pred_fallthru
      _
    // Predicated region
    $region38: #{tpu_custom_call.1} parent=1 // pred_check
      _
    $region39: #{tpu_custom_call.1} parent=1 // pred_check_branch
      %679 = sbr.rel (0) target = $region41
    $region40: #{tpu_custom_call.1} parent=1 // pred_region
      %680 = dma.done [#allocation4], 128
    $region41: #{tpu_custom_call.1} parent=1 // pred_fallthru
      _
    %681 = vsyncpa [#allocation3], 1
    %682 = vsyncpa [#allocation4], 1

</llo_original>
